<compile_context>
chip_gen: v5e
topology: v5e:2x2
jax: 0.10.0
libtpu: 0.0.40
codegen_flags: <defaults>
</compile_context>

<pallas_src>
import numpy as np
import jax
import jax.numpy as jnp
from jax import lax
from jax.experimental import pallas as pl
from jax.experimental.pallas import tpu as pltpu

SUBLANES = 8          # windows packed across sublanes per grid step
UNROLL_MAX_W = 64     # above this, switch from shift-and-add to the MXU band-matmul
_INV_SQRT2 = float(1.0 / np.sqrt(2.0))


def _round_up(x: int, m: int) -> int:
    return (x + m - 1) // m * m


def _cdiv(a: int, b: int) -> int:
    return -(-a // b)


def _finish(s1, s2, point_y, W):
    """Common epilogue: unbiased std then Normal(mean, std).cdf(point)."""
    inv_w = 1.0 / float(W)
    inv_wm1 = 1.0 / float(W - 1)
    mean_y = s1 * inv_w
    var = (s2 - s1 * mean_y) * inv_wm1             # centered -> no f32 cancellation
    std = jnp.sqrt(jnp.maximum(var, 0.0)) + 1e-6   # torch .std(dim=1) is ddof=1
    # exact reciprocal keeps the 1e-5 reference check; O(tm) work so ~free either way
    z = (point_y - mean_y) * pl.reciprocal(std) * _INV_SQRT2
    return 0.5 * (1.0 + lax.erf(z))                # Normal(mean, std).cdf(point)


def _make_unrolled_kernel(W: int, tm: int):
    """Small-W path: fused single-pass shift-and-add (shared slice loads)."""
    def kernel(x_ref, prob_ref):
        # x_ref: (8, Lpad) raw samples; lane m of row r is window (row*tm + m),
        # covering x[m : m + W]; its scored point is x[m + 1].
        x = x_ref[...]
        c = x[:, 0:1]                                 # per-row centering constant
        s1 = jnp.zeros((SUBLANES, tm), jnp.float32)
        s2 = jnp.zeros((SUBLANES, tm), jnp.float32)
        point_y = None
        for j in range(W):                            # one slice feeds BOTH sums
            yj = x[:, j:j + tm] - c
            s1 = s1 + yj
            s2 = s2 + yj * yj
            if j == 1:
                point_y = yj                          # patches[1:, 0] == X[i + 1]
        prob_ref[...] = _finish(s1, s2, point_y, W)
    return kernel


def _make_band_kernel(W: int, tm: int):
    """Large-W path: window sums via one MXU matmul against a 0/1 band matrix."""
    def kernel(x_ref, band_ref, prob_ref):
        x = x_ref[...]                                # (8, Lpad)
        c = x[:, 0:1]
        y = x - c
        lhs = jnp.concatenate([y, y * y], axis=0)     # (16, Lpad): stream band once
        s12 = jnp.dot(lhs, band_ref[...], preferred_element_type=jnp.float32)
        s1 = s12[:SUBLANES]                           # (8, tm) window sums
        s2 = s12[SUBLANES:]                           # (8, tm) window sums of squares
        prob_ref[...] = _finish(s1, s2, y[:, 1:1 + tm], W)
    return kernel


def auto_gaussian_slider(X, tts, slider_perc: float = 0.05, threshold: float = 0.01,
                         tile_m: int = 1024):
    """Returns (prob, mask, t_points, points); boolean-mask selection is done by caller."""
    N = int(X.shape[0])
    W = int(N * slider_perc)                 # window_length
    if W < 2:
        raise ValueError(f"window_length must be >= 2, got {W} (N={N}, slider_perc={slider_perc})")
    M = N - W                                # number of scored windows (== P - 1)
    if M < 1:
        raise ValueError("not enough data for a single scored window")

    # --- tile geometry: each grid step scores SUBLANES x tm windows --------------
    tm = min(_round_up(tile_m, 128), _round_up(_cdiv(M, SUBLANES), 128))
    if M >= 2 * SUBLANES * 128:              # keep G >= 2 so both v7x TCs get work
        tm = min(tm, _round_up(_cdiv(M, 2 * SUBLANES), 128))
    tm = max(tm, 128)
    use_band = W > UNROLL_MAX_W
    if use_band:
        # keep the VMEM-resident band matrix modest (v7x: 64 MiB physical VMEM)
        while tm > 128 and _round_up(tm + W - 1, 128) * tm * 4 > (8 << 20):
            tm -= 128
        # TODO(synk): for W >> tm the band matrix is O(W*tm); a K-tiled band-matmul
        # (grid over K with a VMEM accumulator) would bound it for very large W.
    rows = _cdiv(M, tm)
    G = _cdiv(rows, SUBLANES)
    Lpad = _round_up(tm + W - 1, 128)        # raw samples needed per sublane row

    Xf = X.astype(jnp.float32)

    # (G, 8, Lpad) overlapping raw-X segments: row (g, r) holds
    # X[(g*8 + r)*tm : ... + tm + W - 1], edge-clamped and lane-padded.  Only
    # ~8*(W-1) samples are duplicated per tile (no W-fold unfold blowup).
    # TODO(synk): for W >> tm this gather still re-materializes X ~(1 + W/tm)x; a
    # memory_space=pl.ANY + manual overlapping-DMA formulation would avoid it.
    base = (jnp.arange(G * SUBLANES, dtype=jnp.int32) * tm)[:, None]
    offs = jnp.arange(Lpad, dtype=jnp.int32)[None, :]
    idx = jnp.minimum(base + offs, N - 1)
    xwin = Xf[idx].reshape(G, SUBLANES, Lpad)

    x_spec = pl.BlockSpec((None, SUBLANES, Lpad), lambda g: (g, 0, 0))
    o_spec = pl.BlockSpec((None, SUBLANES, tm), lambda g: (g, 0, 0))
    out_shape = jax.ShapeDtypeStruct((G, SUBLANES, tm), jnp.float32)
    cparams = pltpu.CompilerParams(dimension_semantics=("parallel",))

    if use_band:
        k = jnp.arange(Lpad, dtype=jnp.int32)[:, None]
        m = jnp.arange(tm, dtype=jnp.int32)[None, :]
        band = ((k >= m) & (k < m + W)).astype(jnp.float32)      # (Lpad, tm) 0/1 band
        prob_slab = pl.pallas_call(
            _make_band_kernel(W, tm),
            grid=(G,),
            out_shape=out_shape,
            in_specs=[x_spec,
                      pl.BlockSpec((Lpad, tm), lambda g: (0, 0))],  # resident across steps
            out_specs=o_spec,
            compiler_params=cparams,
        )(xwin, band)
    else:
        prob_slab = pl.pallas_call(
            _make_unrolled_kernel(W, tm),
            grid=(G,),
            out_shape=out_shape,
            in_specs=[x_spec],
            out_specs=o_spec,
            compiler_params=cparams,
        )(xwin)

    prob = prob_slab.reshape(G * SUBLANES * tm)[:M]
    mask = prob <= threshold                 # trivial compare; fused by XLA in the wrapper
    points = Xf[1:M + 1]                     # patches[1:, 0]
    t_points = tts[1:M + 1]                  # t_patches[1:, 0]
    return prob, mask, t_points, points


# ----------------------------- reference & checks --------------------------------

def _reference_prob(Xn: np.ndarray, W: int) -> np.ndarray:
    """float64 numpy mirror of the torch module."""
    from math import erf
    P = Xn.shape[0] - W + 1
    pts = np.stack([Xn[i:i + W] for i in range(P)])
    means = pts[:-1].mean(axis=1)
    stds = np.abs(pts[:-1].std(axis=1, ddof=1)) + 1e-6
    pnts = pts[1:, 0]
    z = (pnts - means) / (stds * np.sqrt(2.0))
    return 0.5 * (1.0 + np.array([erf(v) for v in z]))


def _run_and_check(X, tts, slider_perc, threshold, atol):
    prob, mask, t_points, points = auto_gaussian_slider(X, tts, slider_perc, threshold)
    jax.block_until_ready((prob, mask, t_points, points))

    W = int(X.shape[0] * slider_perc)
    ref = _reference_prob(np.asarray(X, dtype=np.float64), W)
    assert np.allclose(np.asarray(prob, dtype=np.float64), ref, atol=atol), "prob mismatch"
    # compare the mask only where the reference is clearly away from the threshold
    safe = np.abs(ref - threshold) > 10.0 * atol
    assert np.array_equal(np.asarray(mask)[safe], (ref <= threshold)[safe]), "mask mismatch"

    # TODO(synk): torch boolean-mask indexing (variable-length output) has no
    # static-shape Pallas equivalent; applied on host here.
    m = np.asarray(mask)
    t_anomalies = np.asarray(t_points)[m]
    x_anomalies = np.asarray(points)[m]
    assert t_anomalies.shape == x_anomalies.shape


if __name__ == "__main__":
    key = jax.random.PRNGKey(0)
    k1, k2 = jax.random.split(key)

    # Case 1: spec-sized input (N=100 -> W=5), data ~ Normal(10, 1) like the
    # reference script.  Exercises the fused shift-and-add path.
    N1 = 100
    X1 = (10.0 + jax.random.normal(k1, (N1,))).astype(jnp.float32)
    t1 = jnp.arange(N1, dtype=jnp.int32)
    _run_and_check(X1, t1, slider_perc=0.05, threshold=0.01, atol=1e-5)

    # Case 2: larger input (N=6000 -> W=300).  Exercises the MXU band-matmul
    # path and a 2-step grid (looser tolerance covers MXU rounding).
    N2 = 6000
    X2 = (10.0 + jax.random.normal(k2, (N2,))).astype(jnp.float32)
    t2 = jnp.arange(N2, dtype=jnp.int32)
    _run_and_check(X2, t2, slider_perc=0.05, threshold=0.01, atol=2e-3)

    print("KERNEL_OK")
</pallas_src>

<mosaic_0001>
module attributes {stable_mosaic.version = 11 : i64} {
  func.func @kernel(%arg0: i32, %arg1: memref<1x8x256xf32, #tpu.memory_space<vmem>>, %arg2: memref<1x8x128xf32, #tpu.memory_space<vmem>>) attributes {dimension_semantics = [#tpu.dimension_semantics<parallel>], iteration_bounds = array<i64: 1>, scalar_prefetch = 0 : i64, scratch_operands = 0 : i64, tpu.core_type = #tpu.core_type<tc>, window_params = [{transform_indices = @transform_0, window_bounds = array<i64: 1, 8, 256>}, {transform_indices = @transform_1, window_bounds = array<i64: 1, 8, 128>}]} {
    %c0 = arith.constant 0 : index
    %c0_0 = arith.constant 0 : index
    %c0_1 = arith.constant 0 : index
    %0 = vector.load %arg1[%c0, %c0_0, %c0_1] : memref<1x8x256xf32, #tpu.memory_space<vmem>>, vector<1x8x256xf32>
    %1 = vector.shape_cast %0 : vector<1x8x256xf32> to vector<8x256xf32>
    %2 = vector.extract_strided_slice %1 {offsets = [0, 0], sizes = [8, 1], strides = [1, 1]} : vector<8x256xf32> to vector<8x1xf32>
    %cst = arith.constant 0.000000e+00 : f32
    %3 = vector.broadcast %cst : f32 to vector<8x128xf32>
    %cst_2 = arith.constant 0.000000e+00 : f32
    %4 = vector.broadcast %cst_2 : f32 to vector<8x128xf32>
    %5 = vector.extract_strided_slice %1 {offsets = [0, 0], sizes = [8, 128], strides = [1, 1]} : vector<8x256xf32> to vector<8x128xf32>
    %6 = vector.broadcast %2 : vector<8x1xf32> to vector<8x128xf32>
    %7 = arith.subf %5, %6 : vector<8x128xf32>
    %8 = arith.addf %3, %7 : vector<8x128xf32>
    %9 = arith.mulf %7, %7 : vector<8x128xf32>
    %10 = arith.addf %4, %9 : vector<8x128xf32>
    %11 = vector.extract_strided_slice %1 {offsets = [0, 1], sizes = [8, 128], strides = [1, 1]} : vector<8x256xf32> to vector<8x128xf32>
    %12 = vector.broadcast %2 : vector<8x1xf32> to vector<8x128xf32>
    %13 = arith.subf %11, %12 : vector<8x128xf32>
    %14 = arith.addf %8, %13 : vector<8x128xf32>
    %15 = arith.mulf %13, %13 : vector<8x128xf32>
    %16 = arith.addf %10, %15 : vector<8x128xf32>
    %17 = vector.extract_strided_slice %1 {offsets = [0, 2], sizes = [8, 128], strides = [1, 1]} : vector<8x256xf32> to vector<8x128xf32>
    %18 = vector.broadcast %2 : vector<8x1xf32> to vector<8x128xf32>
    %19 = arith.subf %17, %18 : vector<8x128xf32>
    %20 = arith.addf %14, %19 : vector<8x128xf32>
    %21 = arith.mulf %19, %19 : vector<8x128xf32>
    %22 = arith.addf %16, %21 : vector<8x128xf32>
    %23 = vector.extract_strided_slice %1 {offsets = [0, 3], sizes = [8, 128], strides = [1, 1]} : vector<8x256xf32> to vector<8x128xf32>
    %24 = vector.broadcast %2 : vector<8x1xf32> to vector<8x128xf32>
    %25 = arith.subf %23, %24 : vector<8x128xf32>
    %26 = arith.addf %20, %25 : vector<8x128xf32>
    %27 = arith.mulf %25, %25 : vector<8x128xf32>
    %28 = arith.addf %22, %27 : vector<8x128xf32>
    %29 = vector.extract_strided_slice %1 {offsets = [0, 4], sizes = [8, 128], strides = [1, 1]} : vector<8x256xf32> to vector<8x128xf32>
    %30 = vector.broadcast %2 : vector<8x1xf32> to vector<8x128xf32>
    %31 = arith.subf %29, %30 : vector<8x128xf32>
    %32 = arith.addf %26, %31 : vector<8x128xf32>
    %33 = arith.mulf %31, %31 : vector<8x128xf32>
    %34 = arith.addf %28, %33 : vector<8x128xf32>
    %cst_3 = arith.constant 2.000000e-01 : f32
    %35 = vector.broadcast %cst_3 : f32 to vector<8x128xf32>
    %36 = arith.mulf %32, %35 : vector<8x128xf32>
    %37 = arith.mulf %32, %36 : vector<8x128xf32>
    %38 = arith.subf %34, %37 : vector<8x128xf32>
    %cst_4 = arith.constant 2.500000e-01 : f32
    %39 = vector.broadcast %cst_4 : f32 to vector<8x128xf32>
    %40 = arith.mulf %38, %39 : vector<8x128xf32>
    %cst_5 = arith.constant 0.000000e+00 : f32
    %41 = vector.broadcast %cst_5 : f32 to vector<8x128xf32>
    %42 = arith.maximumf %40, %41 : vector<8x128xf32>
    %43 = math.sqrt %42 : vector<8x128xf32>
    %cst_6 = arith.constant 9.99999997E-7 : f32
    %44 = vector.broadcast %cst_6 : f32 to vector<8x128xf32>
    %45 = arith.addf %43, %44 : vector<8x128xf32>
    %46 = arith.subf %13, %36 : vector<8x128xf32>
    %47 = tpu.reciprocal %45 : vector<8x128xf32> -> vector<8x128xf32>
    %48 = arith.mulf %46, %47 : vector<8x128xf32>
    %cst_7 = arith.constant 0.707106769 : f32
    %49 = vector.broadcast %cst_7 : f32 to vector<8x128xf32>
    %50 = arith.mulf %48, %49 : vector<8x128xf32>
    %51 = math.erf %50 : vector<8x128xf32>
    %cst_8 = arith.constant 1.000000e+00 : f32
    %52 = vector.broadcast %cst_8 : f32 to vector<8x128xf32>
    %53 = arith.addf %52, %51 : vector<8x128xf32>
    %cst_9 = arith.constant 5.000000e-01 : f32
    %54 = vector.broadcast %cst_9 : f32 to vector<8x128xf32>
    %55 = arith.mulf %54, %53 : vector<8x128xf32>
    %c0_10 = arith.constant 0 : index
    %c0_11 = arith.constant 0 : index
    %c0_12 = arith.constant 0 : index
    %56 = vector.load %arg2[%c0_10, %c0_11, %c0_12] : memref<1x8x128xf32, #tpu.memory_space<vmem>>, vector<1x8x128xf32>
    %57 = vector.shape_cast %56 : vector<1x8x128xf32> to vector<8x128xf32>
    %58 = vector.shape_cast %55 : vector<8x128xf32> to vector<1x8x128xf32>
    tpu.vector_store %arg2[%c0_10, %c0_11, %c0_12], %58 {strides = array<i32>} : memref<1x8x128xf32, #tpu.memory_space<vmem>>, vector<1x8x128xf32>,
    return
  }
  func.func @transform_0(%arg0: i32) -> (i32, i32, i32) {
    %c0_i32 = arith.constant 0 : i32
    %c0_i32_0 = arith.constant 0 : i32
    %c0_i32_1 = arith.constant 0 : i32
    return %arg0, %c0_i32, %c0_i32_0 : i32, i32, i32
  }
  func.func @transform_1(%arg0: i32) -> (i32, i32, i32) {
    %c0_i32 = arith.constant 0 : i32
    %c0_i32_0 = arith.constant 0 : i32
    %c0_i32_1 = arith.constant 0 : i32
    return %arg0, %c0_i32, %c0_i32_0 : i32, i32, i32
  }
}

</mosaic_0001>

<llo_original>
// kernel: tpu_custom_call.1
$region0: #{tpu_custom_call.1}
  #allocation0 [shape = 'u32[]', space=smem, size = 0x4, offset = 0x4, fixed_abs, tag = 'smem constant byte address 0x4 - core index']
  #allocation1 [shape = 'u32[72,128]{1,0:T(1,128)}', space=vmem, size = 0x9000, scoped, tag = 'internal scratch']
  %s0 = inlined_call_operand.hbm [shape: f32[1,8,256], index: 0, kind: input, shape index: {}]
  %s1 = inlined_call_operand.hbm [shape: f32[1,8,128], index: 1, kind: output, shape index: {}]
  %s2 = sld [smem:[#allocation0]]
  $region18: #{tpu_custom_call.1} parent=0
    _
  %s4 = ssub.s32 1, %s2
  %s5 = scalar_select 0, %s4, %s2
  $region1: #{tpu_custom_call.1} parent=0
    #allocation2 [shape = 'u8[8192]{0}', space=vmem, size = 0x2000, scoped, tag = 'input window, operand 0, single buffered']
    #allocation3 [shape = 's32[1]{0}', space=sflag, size = 0x4, scoped, tag = 'scoped memory for tpu_custom_call.1']
    #allocation4 [shape = 's32[1]{0}', space=sflag, size = 0x4, scoped, tag = 'scoped memory for tpu_custom_call.1']
    #allocation5 [shape = 'u8[4096]{0}', space=vmem, size = 0x1000, scoped, tag = 'output window, operand 0, single buffered']
    %6 = vsyncpa [#allocation3], 0
    %7 = vsyncpa [#allocation4], 0
    // Predicated region
    $region2: #{tpu_custom_call.1} parent=1 // pred_check
      _
    $region3: #{tpu_custom_call.1} parent=1 // pred_check_branch
      %9 = sbr.rel (0) target = $region5
    $region4: #{tpu_custom_call.1} parent=1 // pred_region
      %11 = vsyncadd [#allocation3], 0
      %s13 = sshll.u32 %s0, 4
      %s14 = int_to_ptr.hbm [resolvable:$true] %s13
      %s15 = sshll.u32 [#allocation2], 4
      %s16 = int_to_ptr.vmem [resolvable:$true] %s15
      %18 = dma.hbm_to_vmem [thread:$0]  %s14, 256, %s16, [#allocation3]
    $region5: #{tpu_custom_call.1} parent=1 // pred_fallthru
      _
    // Predicated region
    $region6: #{tpu_custom_call.1} parent=1 // pred_check
      _
    $region7: #{tpu_custom_call.1} parent=1 // pred_check_branch
      %20 = sbr.rel (0) target = $region9
    $region8: #{tpu_custom_call.1} parent=1 // pred_region
      %22 = dma.done [#allocation3], 256
    $region9: #{tpu_custom_call.1} parent=1 // pred_fallthru
      _
    %v23 = vld [vmem:[#allocation2] sm:$0xff]
    %v24 = vld [vmem:[#allocation2 + $0x8] sm:$0xff]
    %26 = vset.pattern.permute.xlu0 0
    %27 = vperm.xlu0 %26, %v23
    %v28 = vpop.permute.xlu0 %27
    %v30 = vsub.f32 %v23, %v28
    %v31 = vadd.f32 %v30, 0.0
    %v32 = vmul.f32 %v30, %v30
    %v33 = vadd.f32 %v32, 0.0
    %v34 = vsub.f32 %v24, %v28
    %37 = vrot.lane.b32.xlu0 %v30, 127
    %v38 = vpop.permute.xlu0 %37
    %39 = vrot.lane.b32.xlu0 %v34, 127
    %v40 = vpop.permute.xlu0 %39
    %vm41 = vcmask 1039360
    %v42 = vsel %vm41, %v38, %v40
    %v44 = vadd.f32 %v31, %v42
    %v45 = vmul.f32 %v34, %v34
    %48 = vrot.lane.b32.xlu0 %v32, 127
    %v49 = vpop.permute.xlu0 %48
    %50 = vrot.lane.b32.xlu0 %v45, 127
    %v51 = vpop.permute.xlu0 %50
    %v52 = vsel %vm41, %v49, %v51
    %v54 = vadd.f32 %v33, %v52
    %55 = vrot.lane.b32.xlu0 %v30, 126
    %v56 = vpop.permute.xlu0 %55
    %57 = vrot.lane.b32.xlu0 %v34, 126
    %v58 = vpop.permute.xlu0 %57
    %vm59 = vcmask 1031168
    %v60 = vsel %vm59, %v56, %v58
    %v62 = vadd.f32 %v44, %v60
    %63 = vrot.lane.b32.xlu0 %v32, 126
    %v64 = vpop.permute.xlu0 %63
    %65 = vrot.lane.b32.xlu0 %v45, 126
    %v66 = vpop.permute.xlu0 %65
    %v67 = vsel %vm59, %v64, %v66
    %v69 = vadd.f32 %v54, %v67
    %70 = vrot.lane.b32.xlu0 %v30, 125
    %v71 = vpop.permute.xlu0 %70
    %72 = vrot.lane.b32.xlu0 %v34, 125
    %v73 = vpop.permute.xlu0 %72
    %vm74 = vcmask 1022976
    %v75 = vsel %vm74, %v71, %v73
    %v77 = vadd.f32 %v62, %v75
    %78 = vrot.lane.b32.xlu0 %v32, 125
    %v79 = vpop.permute.xlu0 %78
    %80 = vrot.lane.b32.xlu0 %v45, 125
    %v81 = vpop.permute.xlu0 %80
    %v82 = vsel %vm74, %v79, %v81
    %v84 = vadd.f32 %v69, %v82
    %85 = vrot.lane.b32.xlu0 %v30, 124
    %v86 = vpop.permute.xlu0 %85
    %87 = vrot.lane.b32.xlu0 %v34, 124
    %v88 = vpop.permute.xlu0 %87
    %vm89 = vcmask 1014784
    %v90 = vsel %vm89, %v86, %v88
    %v92 = vadd.f32 %v77, %v90
    %93 = vrot.lane.b32.xlu0 %v32, 124
    %v94 = vpop.permute.xlu0 %93
    %95 = vrot.lane.b32.xlu0 %v45, 124
    %v96 = vpop.permute.xlu0 %95
    %v97 = vsel %vm89, %v94, %v96
    %v99 = vadd.f32 %v84, %v97
    %v100 = vmul.f32 %v92, 0.2
    %v101 = vmul.f32 %v92, %v100
    %v102 = vsub.f32 %v99, %v101
    %v103 = vmul.f32 %v102, 0.25
    %v104 = vmax.f32 %v103, 0.0
    %v105 = vrsqrt.pop %v104
    %v106 = vmul.f32 %v105, %v104
    %v107 = vmul.f32 %v106, %v105
    %v108 = vmul.f32 0.5, %v107
    %v109 = vsub.f32 1.5, %v108
    %v110 = vmul.f32 %v105, %v109
    %v111 = vmul.f32 %v104, %v110
    %vm112 = vcmp.eq.f32.partialorder %v104, inf
    %v113 = vsel %vm112, %v104, %v111
    %vm114 = vcmp.eq.f32.partialorder %v104, 0.0
    %v115 = vand.u32 %v104, 2147483648
    %v116 = vsel %vm114, %v115, %v113
    %v117 = vadd.f32 %v116, 1e-06
    %119 = vrot.lane.b32.xlu0 %v100, 1
    %v120 = vpop.permute.xlu0 %119
    %v122 = vsub.f32 %v30, %v120
    %v123 = vsub.f32 %v34, %v120
    %v124 = vrcp.pop %v117
    %v125 = vmul.f32 %v117, %v124
    %v126 = vsub.f32 1.0, %v125
    %v127 = vmul.f32 %v124, %v126
    %v128 = vadd.f32 %v124, %v127
    %vm129 = vweird.f32 %v117
    %vm130 = vweird.f32 %v124
    %vm131 = vmor %vm129, %vm130
    %v132 = vsel %vm131, %v124, %v128
    %v133 = vand.u32 2147483647, %v117
    %vm134 = vcmp.eq.f32.partialorder %v133, 8.507059e+37
    %v135 = vand.u32 %v117, 2147483648
    %v136 = vor.u32 1.1754944e-38, %v135
    %v137 = vsel %vm134, %v136, %v132
    %139 = vrot.lane.b32.xlu0 %v137, 1
    %v140 = vpop.permute.xlu0 %139
    %v142 = vmul.f32 %v122, %v140
    %v143 = vmul.f32 %v123, %v140
    %v144 = vmul.f32 %v142, 0.70710677
    %v145 = vmul.f32 %v143, 0.70710677
    %v146 = vmul.f32 %v144, %v144
    %v147 = vmin.f32 16.0, %v146
    %v148 = vmul.f32 %v147, 2.1237322e-06
    %v149 = vadd.f32 %v148, 0.00028619796
    %v150 = vmul.f32 %v147, %v149
    %v151 = vadd.f32 %v150, 0.0036580483
    %v152 = vmul.f32 %v147, %v151
    %v153 = vadd.f32 %v152, 0.05243302
    %v154 = vmul.f32 %v147, %v153
    %v155 = vadd.f32 %v154, 0.18741608
    %v156 = vmul.f32 %v147, %v155
    %v157 = vadd.f32 %v156, 1.1283791
    %v158 = vmul.f32 %v144, %v157
    %v159 = vmul.f32 %v147, 3.8918573e-05
    %v160 = vadd.f32 %v159, 0.001143296
    %v161 = vmul.f32 %v147, %v160
    %v162 = vadd.f32 %v161, 0.014752088
    %v163 = vmul.f32 %v147, %v162
    %v164 = vadd.f32 %v163, 0.112945676
    %v165 = vmul.f32 %v147, %v164
    %v166 = vadd.f32 %v165, 0.4994258
    %v167 = vmul.f32 %v147, %v166
    %v168 = vadd.f32 %v167, 1.0
    %v169 = vrcp.pop %v168
    %v170 = vmul.f32 %v168, %v169
    %v171 = vsub.f32 1.0, %v170
    %v172 = vmul.f32 %v169, %v171
    %v173 = vadd.f32 %v169, %v172
    %vm174 = vweird.f32 %v168
    %vm175 = vweird.f32 %v169
    %vm176 = vmor %vm174, %vm175
    %v177 = vsel %vm176, %v169, %v173
    %v178 = vand.u32 2147483647, %v168
    %vm179 = vcmp.eq.f32.partialorder %v178, 8.507059e+37
    %v180 = vand.u32 %v168, 2147483648
    %v181 = vor.u32 1.1754944e-38, %v180
    %v182 = vsel %vm179, %v181, %v177
    %v183 = vmul.f32 %v158, %v182
    %v184 = vmin.f32 %v183, 1.0
    %v185 = vmax.f32 %v184, -1.0
    %v186 = vmul.f32 %v145, %v145
    %v187 = vmin.f32 16.0, %v186
    %v188 = vmul.f32 %v187, 2.1237322e-06
    %v189 = vadd.f32 %v188, 0.00028619796
    %v190 = vmul.f32 %v187, %v189
    %v191 = vadd.f32 %v190, 0.0036580483
    %v192 = vmul.f32 %v187, %v191
    %v193 = vadd.f32 %v192, 0.05243302
    %v194 = vmul.f32 %v187, %v193
    %v195 = vadd.f32 %v194, 0.18741608
    %v196 = vmul.f32 %v187, %v195
    %v197 = vadd.f32 %v196, 1.1283791
    %v198 = vmul.f32 %v145, %v197
    %v199 = vmul.f32 %v187, 3.8918573e-05
    %v200 = vadd.f32 %v199, 0.001143296
    %v201 = vmul.f32 %v187, %v200
    %v202 = vadd.f32 %v201, 0.014752088
    %v203 = vmul.f32 %v187, %v202
    %v204 = vadd.f32 %v203, 0.112945676
    %v205 = vmul.f32 %v187, %v204
    %v206 = vadd.f32 %v205, 0.4994258
    %v207 = vmul.f32 %v187, %v206
    %v208 = vadd.f32 %v207, 1.0
    %v209 = vrcp.pop %v208
    %v210 = vmul.f32 %v208, %v209
    %v211 = vsub.f32 1.0, %v210
    %v212 = vmul.f32 %v209, %v211
    %v213 = vadd.f32 %v209, %v212
    %vm214 = vweird.f32 %v208
    %vm215 = vweird.f32 %v209
    %vm216 = vmor %vm214, %vm215
    %v217 = vsel %vm216, %v209, %v213
    %v218 = vand.u32 2147483647, %v208
    %vm219 = vcmp.eq.f32.partialorder %v218, 8.507059e+37
    %v220 = vand.u32 %v208, 2147483648
    %v221 = vor.u32 1.1754944e-38, %v220
    %v222 = vsel %vm219, %v221, %v217
    %v223 = vmul.f32 %v198, %v222
    %v224 = vmin.f32 %v223, 1.0
    %v225 = vmax.f32 %v224, -1.0
    %v226 = vadd.f32 %v185, 1.0
    %v227 = vadd.f32 %v225, 1.0
    %v228 = vmul.f32 %v226, 0.5
    %v229 = vmul.f32 %v227, 0.5
    %232 = vrot.lane.b32.xlu0 %v228, 127
    %v233 = vpop.permute.xlu0 %232
    %234 = vrot.lane.b32.xlu0 %v229, 127
    %v235 = vpop.permute.xlu0 %234
    %v236 = vsel %vm41, %v233, %v235
    %238 = vst [vmem:[#allocation5] sm:$0xff] %v236
    // Predicated region
    $region10: #{tpu_custom_call.1} parent=1 // pred_check
      _
    $region11: #{tpu_custom_call.1} parent=1 // pred_check_branch
      %240 = sbr.rel (0) target = $region13
    $region12: #{tpu_custom_call.1} parent=1 // pred_region
      %242 = vsyncadd [#allocation4], 0
      %s244 = sshll.u32 [#allocation5], 4
      %s245 = int_to_ptr.vmem [resolvable:$true] %s244
      %s246 = sshll.u32 %s1, 4
      %s247 = int_to_ptr.hbm [resolvable:$true] %s246
      %249 = dma.vmem_to_hbm [thread:$0]  %s245, 128, %s247, [#allocation4]
    $region13: #{tpu_custom_call.1} parent=1 // pred_fallthru
      _
    // Predicated region
    $region14: #{tpu_custom_call.1} parent=1 // pred_check
      _
    $region15: #{tpu_custom_call.1} parent=1 // pred_check_branch
      %251 = sbr.rel (0) target = $region17
    $region16: #{tpu_custom_call.1} parent=1 // pred_region
      %253 = dma.done [#allocation4], 128
    $region17: #{tpu_custom_call.1} parent=1 // pred_fallthru
      _
    %254 = vsyncpa [#allocation3], 1
    %255 = vsyncpa [#allocation4], 1

</llo_original>
